<compile_context>
chip_gen: v6e
topology: v6e:2x2x1
jax: 0.10.0
libtpu: 0.0.40
codegen_flags: <defaults>
</compile_context>

<pallas_src>
import jax
import jax.numpy as jnp
from jax.experimental import pallas as pl
from jax.experimental.pallas import tpu as pltpu


_MIB = 1 << 20
_VMEM_TARGET_BYTES = 34 * _MIB     # working-set target, comfortably legal on v7x
_VMEM_LIMIT_CAP = 50 * _MIB        # never ask for more than ~50 MiB scoped VMEM


def _round_up(x, m):
    return (x + m - 1) // m * m


# --------------------------------------------------------------------------------------
# Kernels
# --------------------------------------------------------------------------------------
def _edge_mlp_gather_kernel(ei_ref, ea_ref, xsrc_ref, xdst_ref,
                            w1_ref, b1_ref, w2t_ref, b2_ref, o_ref):
    """In-kernel gather variant: o[:, e] = W2^T relu(W1^T [xs|xd|ea] + b1) + b2."""
    D = ea_ref.shape[-1]
    tile = ea_ref.shape[0]
    n_src = xsrc_ref.shape[0]
    n_dst = xdst_ref.shape[0]
    cdt = xsrc_ref.dtype          # bf16 compute dtype
    f32 = jnp.float32

    # One-hot gather on the MXU: exact row selection with f32 accumulation. Ids that are
    # out of range (e.g. garbage rows of a partial final block) match nothing -> zero
    # rows, so no unchecked VMEM reads are possible.
    src_id = ei_ref[:, 0:1]                                               # [tile, 1] int32
    dst_id = ei_ref[:, 1:2]
    sel_s = jnp.where(
        jax.lax.broadcasted_iota(jnp.int32, (tile, n_src), 1) == src_id, 1.0, 0.0
    ).astype(cdt)                                                         # [tile, n_src]
    sel_d = jnp.where(
        jax.lax.broadcasted_iota(jnp.int32, (tile, n_dst), 1) == dst_id, 1.0, 0.0
    ).astype(cdt)                                                         # [tile, n_dst]
    xs = jnp.dot(sel_s, xsrc_ref[...], preferred_element_type=f32).astype(cdt)
    xd = jnp.dot(sel_d, xdst_ref[...], preferred_element_type=f32).astype(cdt)
    ea = ea_ref[...].astype(cdt)                                          # cast in-kernel

    # Layer 1: [xs|xd|ea] @ W1 + b1 as three K=D dots against the row blocks of the
    # merged W1 (the concatenated activation is never materialized); f32 accumulation.
    acc = jnp.dot(xs, w1_ref[:D, :], preferred_element_type=f32)
    acc = acc + jnp.dot(xd, w1_ref[D:2 * D, :], preferred_element_type=f32)
    acc = acc + jnp.dot(ea, w1_ref[2 * D:, :], preferred_element_type=f32)
    h = jnp.maximum(acc + b1_ref[...], 0.0).astype(cdt)                   # [tile, H_pad]

    # Layer 2, emitted transposed ([O, tile]) so the HBM writeback is lane-dense.
    o_t = jax.lax.dot_general(w2t_ref[...], h, (((1,), (1,)), ((), ())),
                              preferred_element_type=f32)                 # [O, tile]
    o_ref[...] = o_t + b2_ref[...]


def _edge_mlp_concat_kernel(xcat_ref, w1_ref, b1_ref, w2t_ref, b2_ref, o_ref):
    """Host-gather fallback: consumes a fused [tile, 3D] bf16 activation (one K=3D dot)."""
    f32 = jnp.float32
    acc = jnp.dot(xcat_ref[...], w1_ref[...], preferred_element_type=f32)
    h = jnp.maximum(acc + b1_ref[...], 0.0).astype(w2t_ref.dtype)
    o_t = jax.lax.dot_general(w2t_ref[...], h, (((1,), (1,)), ((), ())),
                              preferred_element_type=f32)
    o_ref[...] = o_t + b2_ref[...]


# --------------------------------------------------------------------------------------
# Host-side wrapper
# --------------------------------------------------------------------------------------
def _choose_tile(E, tile_e):
    if E <= 256:
        return E                                   # one exact block (block dims == array dims)
    tile = min(_round_up(tile_e, 128), _round_up(E, 128))
    # Keep >= 2 grid steps so v7x's two TensorCores both get work.
    tile = min(tile, _round_up(pl.cdiv(E, 2), 128))
    return max(tile, 128)


def _vmem_bytes(tile, D, H_pad, n_src, n_dst, kernel_gather):
    bf, f4 = 2, 4
    v = 0
    if kernel_gather:
        v += 2 * tile * 2 * f4                     # double-buffered edge-id blocks (int32)
        v += 2 * tile * D * f4                     # double-buffered edge_attr blocks (f32)
        v += (n_src + n_dst) * D * bf              # resident node tables (bf16)
        v += 2 * tile * max(n_src, n_dst) * bf     # one-hot selection temporaries
        v += 3 * tile * D * bf                     # gathered / cast rows
    else:
        v += 2 * tile * 3 * D * bf                 # double-buffered fused [tile, 3D] blocks
    v += tile * H_pad * (f4 + bf)                  # layer-1 accumulator (f32) + h (bf16)
    v += 2 * 8 * tile * f4                         # double-buffered [O, tile] f32 out blocks
    v += 3 * D * H_pad * bf + H_pad * f4 + 8 * H_pad * bf + 8 * f4   # resident weights
    return v


def hetero_edge_head_forward(x_src, x_dst, edge_attr, edge_index, y, params, *,
                             tile_e=8192, node_gather="auto", max_onehot_rows=256,
                             vmem_limit_bytes=None):
    """Pallas implementation of HeteroGNNEdgeHead.forward (return_edges=False).

    x_src:      [N_src, D]  source-node-type features
    x_dst:      [N_dst, D]  destination-node-type features
    edge_attr:  [E, D]      edge features of the task edge type
    edge_index: [2, E]      int edge index (row 0 = src, row 1 = dst)
    y:          [E]         labels (passed through)
    params:     dict with w1 [3D, H], b1 [H], w2 [H, O], b2 [O]  (float32)
    node_gather: "auto" | "kernel" | "host"
    """
    D = x_src.shape[-1]
    E = edge_attr.shape[0]
    n_src, n_dst = x_src.shape[0], x_dst.shape[0]
    H = params["w1"].shape[1]
    O = params["w2"].shape[1]
    assert x_dst.shape[-1] == D and edge_attr.shape[-1] == D
    assert params["w1"].shape[0] == 3 * D

    cdt = jnp.bfloat16
    H_pad = _round_up(H, 128)      # lane-dense hidden width (zero padding is exact)

    gather_ok = (D % 16 == 0) and max(n_src, n_dst) <= max_onehot_rows
    if node_gather == "kernel":
        assert gather_ok, ("in-kernel gather needs D % 16 == 0 and node tables with at "
                           f"most {max_onehot_rows} rows")
        kernel_gather = True
    elif node_gather == "host":
        kernel_gather = False
    else:
        kernel_gather = gather_ok

    tile = _choose_tile(E, tile_e)
    if E > 256:
        # Shrink the tile until the working set fits the per-generation VMEM target
        # (v7x: 64 MiB physical / 32 MiB scoped default; v5e/v6e: 128 MiB physical).
        while tile > 512 and _vmem_bytes(tile, D, H_pad, n_src, n_dst,
                                         kernel_gather) > _VMEM_TARGET_BYTES:
            tile = max(512, _round_up(tile // 2, 128))
    grid = (pl.cdiv(E, tile),)     # no host padding; Pallas masks the partial tail block

    # --- weights: merged W1, lane-dense padded hidden width, transposed W2 -------------
    w1 = jnp.zeros((3 * D, H_pad), cdt).at[:, :H].set(params["w1"].astype(cdt))
    b1 = jnp.zeros((1, H_pad), jnp.float32).at[:, :H].set(params["b1"].astype(jnp.float32))
    w2t = jnp.zeros((O, H_pad), cdt).at[:, :H].set(params["w2"].T.astype(cdt))
    b2 = params["b2"].astype(jnp.float32).reshape(O, 1)

    def const(shape):
        return pl.BlockSpec(shape, lambda i: tuple(0 for _ in shape))

    weight_specs = [const((3 * D, H_pad)), const((1, H_pad)),
                    const((O, H_pad)), const((O, 1))]

    if vmem_limit_bytes is None:
        est = _vmem_bytes(tile, D, H_pad, n_src, n_dst, kernel_gather)
        vmem_limit_bytes = int(min(max(est + est // 2, 32 * _MIB), _VMEM_LIMIT_CAP))

    cparams = pltpu.CompilerParams(dimension_semantics=("parallel",),
                                   vmem_limit_bytes=vmem_limit_bytes)
    out_shape = jax.ShapeDtypeStruct((O, E), jnp.float32)        # transposed, lane-dense
    out_spec = pl.BlockSpec((O, tile), lambda i: (0, i))

    if kernel_gather:
        # Edge ids streamed per tile; node tables VMEM-resident (bf16, fetched once).
        ei = edge_index.T.astype(jnp.int32)                      # [E, 2]
        out_t = pl.pallas_call(
            _edge_mlp_gather_kernel,
            out_shape=out_shape,
            grid=grid,
            in_specs=[
                pl.BlockSpec((tile, 2), lambda i: (i, 0)),       # edge ids
                pl.BlockSpec((tile, D), lambda i: (i, 0)),       # edge_attr (f32, cast in-kernel)
                const((n_src, D)),                               # resident src node table (bf16)
                const((n_dst, D)),                               # resident dst node table (bf16)
                *weight_specs,
            ],
            out_specs=out_spec,
            compiler_params=cparams,
        )(ei, edge_attr, x_src.astype(cdt), x_dst.astype(cdt), w1, b1, w2t, b2)
    else:
        # Fallback for large node tables: one fused host gather+concat+cast pass.
        # TODO(synk): replace with an in-kernel dynamic/DMA gather for large node tables.
        xcat = jnp.concatenate(
            [jnp.take(x_src, edge_index[0], axis=0),
             jnp.take(x_dst, edge_index[1], axis=0),
             edge_attr], axis=-1).astype(cdt)                    # [E, 3D] bf16
        out_t = pl.pallas_call(
            _edge_mlp_concat_kernel,
            out_shape=out_shape,
            grid=grid,
            in_specs=[pl.BlockSpec((tile, 3 * D), lambda i: (i, 0)), *weight_specs],
            out_specs=out_spec,
            compiler_params=cparams,
        )(xcat, w1, b1, w2t, b2)

    # Consumers that can take the [O, E] layout directly may skip this tiny transpose.
    pred = out_t.T
    return pred, y


# --------------------------------------------------------------------------------------
# Reference / setup
# --------------------------------------------------------------------------------------
def init_params(key, dim_in, dim_out):
    """Deterministic synthetic init of the post-MP MLP (2 layers)."""
    D3 = 3 * dim_in
    k1, k2, k3, k4 = jax.random.split(key, 4)
    return {
        "w1": jax.random.normal(k1, (D3, D3), jnp.float32) * (1.0 / jnp.sqrt(D3)),
        "b1": jax.random.normal(k2, (D3,), jnp.float32) * 0.01,
        "w2": jax.random.normal(k3, (D3, dim_out), jnp.float32) * (1.0 / jnp.sqrt(D3)),
        "b2": jax.random.normal(k4, (dim_out,), jnp.float32) * 0.01,
    }


def reference_forward(x_src, x_dst, edge_attr, edge_index, params):
    pred = jnp.concatenate(
        [x_src[edge_index[0]], x_dst[edge_index[1]], edge_attr], axis=-1)
    h = jnp.maximum(pred @ params["w1"] + params["b1"], 0.0)
    return h @ params["w2"] + params["b2"]


def reference_forward_bf16(x_src, x_dst, edge_attr, edge_index, params):
    """Models the kernel's quantization: bf16 inputs/weights/h, f32 accumulation/biases."""
    bf = lambda a: a.astype(jnp.bfloat16).astype(jnp.float32)
    pred = bf(jnp.concatenate(
        [x_src[edge_index[0]], x_dst[edge_index[1]], edge_attr], axis=-1))
    h = jnp.maximum(pred @ bf(params["w1"]) + params["b1"], 0.0)
    h = bf(h)   # the kernel rounds h to bf16 before the second matmul
    return h @ bf(params["w2"]) + params["b2"]


if __name__ == "__main__":
    key = jax.random.PRNGKey(0)
    dim_in = 32          # per-entity feature dim (node feats and edge_attr share it)
    dim_out = 2          # e.g. binary fraud classification
    n_src, n_dst = 20, 24
    E = 64               # number of task edges

    ks = jax.random.split(key, 6)
    x_src = jax.random.normal(ks[0], (n_src, dim_in), jnp.float32)
    x_dst = jax.random.normal(ks[1], (n_dst, dim_in), jnp.float32)
    edge_attr = jax.random.normal(ks[2], (E, dim_in), jnp.float32)
    edge_index = jnp.stack([
        jax.random.randint(ks[3], (E,), 0, n_src),
        jax.random.randint(ks[4], (E,), 0, n_dst),
    ]).astype(jnp.int32)
    y = jax.random.randint(ks[5], (E,), 0, dim_out).astype(jnp.int32)

    params = init_params(jax.random.PRNGKey(42), dim_in, dim_out)

    # TODO(synk): the train/val/test split_mask + torch.isin e_id filtering is dataset
    # bookkeeping with no tensor hot path; here all E task edges are treated as selected.

    # Primary path: in-kernel one-hot gather (node tables are small enough here).
    pred, label = hetero_edge_head_forward(
        x_src, x_dst, edge_attr, edge_index, y, params)
    pred = jax.block_until_ready(pred)
    assert pred.shape == (E, dim_out)
    assert label.shape == (E,)

    # Also exercise the host-gather fallback (large-node-table deployments).
    pred_host, _ = hetero_edge_head_forward(
        x_src, x_dst, edge_attr, edge_index, y, params, node_gather="host")
    pred_host = jax.block_until_ready(pred_host)

    # Loose check against the exact f32 semantics of the PyTorch module (bf16 compute
    # dtype is an intentional optimization -> ~1e-2-level deviation).
    ref_f32 = reference_forward(x_src, x_dst, edge_attr, edge_index, params)
    assert jnp.allclose(pred, ref_f32, atol=1e-1, rtol=1e-1), "mismatch vs f32 reference"
    assert jnp.allclose(pred_host, ref_f32, atol=1e-1, rtol=1e-1), "host path vs f32 ref"

    # Tight check against a reference that models the kernel's bf16 rounding (inputs,
    # weights, and the hidden activation h before the second matmul).
    ref_q = reference_forward_bf16(x_src, x_dst, edge_attr, edge_index, params)
    assert jnp.allclose(pred, ref_q, atol=2e-2, rtol=2e-2), "mismatch vs bf16 reference"

    # The two kernel paths differ only in f32 accumulation order.
    assert jnp.allclose(pred, pred_host, atol=1e-3, rtol=1e-3), "gather vs host path mismatch"

    print("KERNEL_OK")
</pallas_src>

<mosaic_0001>
module attributes {stable_mosaic.version = 11 : i64} {
  func.func @_edge_mlp_gather_kernel(%arg0: i32, %arg1: memref<64x2xi32, #tpu.memory_space<vmem>>, %arg2: memref<64x32xf32, #tpu.memory_space<vmem>>, %arg3: memref<20x32xbf16, #tpu.memory_space<vmem>>, %arg4: memref<24x32xbf16, #tpu.memory_space<vmem>>, %arg5: memref<96x128xbf16, #tpu.memory_space<vmem>>, %arg6: memref<1x128xf32, #tpu.memory_space<vmem>>, %arg7: memref<2x128xbf16, #tpu.memory_space<vmem>>, %arg8: memref<2x1xf32, #tpu.memory_space<vmem>>, %arg9: memref<2x64xf32, #tpu.memory_space<vmem>>) attributes {dimension_semantics = [#tpu.dimension_semantics<parallel>], iteration_bounds = array<i64: 1>, scalar_prefetch = 0 : i64, scratch_operands = 0 : i64, tpu.core_type = #tpu.core_type<tc>, window_params = [{transform_indices = @transform_0, window_bounds = array<i64: 64, 2>}, {transform_indices = @transform_1, window_bounds = array<i64: 64, 32>}, {pipeline_mode = #tpu.pipeline_mode<synchronous>, transform_indices = @transform_2, window_bounds = array<i64: 20, 32>}, {pipeline_mode = #tpu.pipeline_mode<synchronous>, transform_indices = @transform_3, window_bounds = array<i64: 24, 32>}, {pipeline_mode = #tpu.pipeline_mode<synchronous>, transform_indices = @transform_4, window_bounds = array<i64: 96, 128>}, {pipeline_mode = #tpu.pipeline_mode<synchronous>, transform_indices = @transform_5, window_bounds = array<i64: 1, 128>}, {pipeline_mode = #tpu.pipeline_mode<synchronous>, transform_indices = @transform_6, window_bounds = array<i64: 2, 128>}, {pipeline_mode = #tpu.pipeline_mode<synchronous>, transform_indices = @transform_7, window_bounds = array<i64: 2, 1>}, {transform_indices = @transform_8, window_bounds = array<i64: 2, 64>}]} {
    %c0 = arith.constant 0 : index
    %c0_0 = arith.constant 0 : index
    %0 = vector.load %arg1[%c0, %c0_0] : memref<64x2xi32, #tpu.memory_space<vmem>>, vector<64x1xi32>
    %c0_1 = arith.constant 0 : index
    %c1 = arith.constant 1 : index
    %1 = vector.load %arg1[%c0_1, %c1] : memref<64x2xi32, #tpu.memory_space<vmem>>, vector<64x1xi32>
    %2 = tpu.iota {dimensions = array<i32: 1>} : vector<64x20xi32>
    %3 = vector.broadcast %0 : vector<64x1xi32> to vector<64x20xi32>
    %4 = arith.cmpi eq, %2, %3 : vector<64x20xi32>
    %cst = arith.constant 1.000000e+00 : f32
    %cst_2 = arith.constant 0.000000e+00 : f32
    %5 = vector.broadcast %cst : f32 to vector<64x20xf32>
    %6 = vector.broadcast %cst_2 : f32 to vector<64x20xf32>
    %7 = arith.select %4, %5, %6 : vector<64x20xi1>, vector<64x20xf32>
    %8 = arith.truncf %7 : vector<64x20xf32> to vector<64x20xbf16>
    %9 = tpu.iota {dimensions = array<i32: 1>} : vector<64x24xi32>
    %10 = vector.broadcast %1 : vector<64x1xi32> to vector<64x24xi32>
    %11 = arith.cmpi eq, %9, %10 : vector<64x24xi32>
    %cst_3 = arith.constant 1.000000e+00 : f32
    %cst_4 = arith.constant 0.000000e+00 : f32
    %12 = vector.broadcast %cst_3 : f32 to vector<64x24xf32>
    %13 = vector.broadcast %cst_4 : f32 to vector<64x24xf32>
    %14 = arith.select %11, %12, %13 : vector<64x24xi1>, vector<64x24xf32>
    %15 = arith.truncf %14 : vector<64x24xf32> to vector<64x24xbf16>
    %c0_5 = arith.constant 0 : index
    %c0_6 = arith.constant 0 : index
    %16 = vector.load %arg3[%c0_5, %c0_6] : memref<20x32xbf16, #tpu.memory_space<vmem>>, vector<20x32xbf16>
    %cst_7 = arith.constant dense<0.000000e+00> : vector<64x32xf32>
    %17 = tpu.matmul %8, %16, %cst_7 {dimension_numbers = #tpu.dot_dimension_numbers<[1], [0], [0], [1], [0, 0, 1, 1], [], []>} : vector<64x20xbf16>, vector<20x32xbf16>, vector<64x32xf32> -> vector<64x32xf32>
    %18 = arith.truncf %17 : vector<64x32xf32> to vector<64x32xbf16>
    %c0_8 = arith.constant 0 : index
    %c0_9 = arith.constant 0 : index
    %19 = vector.load %arg4[%c0_8, %c0_9] : memref<24x32xbf16, #tpu.memory_space<vmem>>, vector<24x32xbf16>
    %cst_10 = arith.constant dense<0.000000e+00> : vector<64x32xf32>
    %20 = tpu.matmul %15, %19, %cst_10 {dimension_numbers = #tpu.dot_dimension_numbers<[1], [0], [0], [1], [0, 0, 1, 1], [], []>} : vector<64x24xbf16>, vector<24x32xbf16>, vector<64x32xf32> -> vector<64x32xf32>
    %21 = arith.truncf %20 : vector<64x32xf32> to vector<64x32xbf16>
    %c0_11 = arith.constant 0 : index
    %c0_12 = arith.constant 0 : index
    %22 = vector.load %arg2[%c0_11, %c0_12] : memref<64x32xf32, #tpu.memory_space<vmem>>, vector<64x32xf32>
    %23 = arith.truncf %22 : vector<64x32xf32> to vector<64x32xbf16>
    %c0_13 = arith.constant 0 : index
    %c0_14 = arith.constant 0 : index
    %24 = vector.load %arg5[%c0_13, %c0_14] : memref<96x128xbf16, #tpu.memory_space<vmem>>, vector<32x128xbf16>
    %cst_15 = arith.constant dense<0.000000e+00> : vector<64x128xf32>
    %25 = tpu.matmul %18, %24, %cst_15 {dimension_numbers = #tpu.dot_dimension_numbers<[1], [0], [0], [1], [0, 0, 1, 1], [], []>} : vector<64x32xbf16>, vector<32x128xbf16>, vector<64x128xf32> -> vector<64x128xf32>
    %c32 = arith.constant 32 : index
    %c0_16 = arith.constant 0 : index
    %26 = vector.load %arg5[%c32, %c0_16] : memref<96x128xbf16, #tpu.memory_space<vmem>>, vector<32x128xbf16>
    %cst_17 = arith.constant dense<0.000000e+00> : vector<64x128xf32>
    %27 = tpu.matmul %21, %26, %cst_17 {dimension_numbers = #tpu.dot_dimension_numbers<[1], [0], [0], [1], [0, 0, 1, 1], [], []>} : vector<64x32xbf16>, vector<32x128xbf16>, vector<64x128xf32> -> vector<64x128xf32>
    %28 = arith.addf %25, %27 : vector<64x128xf32>
    %c64 = arith.constant 64 : index
    %c0_18 = arith.constant 0 : index
    %29 = vector.load %arg5[%c64, %c0_18] : memref<96x128xbf16, #tpu.memory_space<vmem>>, vector<32x128xbf16>
    %cst_19 = arith.constant dense<0.000000e+00> : vector<64x128xf32>
    %30 = tpu.matmul %23, %29, %cst_19 {dimension_numbers = #tpu.dot_dimension_numbers<[1], [0], [0], [1], [0, 0, 1, 1], [], []>} : vector<64x32xbf16>, vector<32x128xbf16>, vector<64x128xf32> -> vector<64x128xf32>
    %31 = arith.addf %28, %30 : vector<64x128xf32>
    %c0_20 = arith.constant 0 : index
    %c0_21 = arith.constant 0 : index
    %32 = vector.load %arg6[%c0_20, %c0_21] : memref<1x128xf32, #tpu.memory_space<vmem>>, vector<1x128xf32>
    %33 = vector.broadcast %32 : vector<1x128xf32> to vector<64x128xf32>
    %34 = arith.addf %31, %33 : vector<64x128xf32>
    %cst_22 = arith.constant 0.000000e+00 : f32
    %35 = vector.broadcast %cst_22 : f32 to vector<64x128xf32>
    %36 = arith.maximumf %34, %35 : vector<64x128xf32>
    %37 = arith.truncf %36 : vector<64x128xf32> to vector<64x128xbf16>
    %c0_23 = arith.constant 0 : index
    %c0_24 = arith.constant 0 : index
    %38 = vector.load %arg7[%c0_23, %c0_24] : memref<2x128xbf16, #tpu.memory_space<vmem>>, vector<2x128xbf16>
    %cst_25 = arith.constant dense<0.000000e+00> : vector<2x64xf32>
    %39 = tpu.matmul %38, %37, %cst_25 {dimension_numbers = #tpu.dot_dimension_numbers<[1], [1], [0], [0], [0, 0, 1, 0], [], []>} : vector<2x128xbf16>, vector<64x128xbf16>, vector<2x64xf32> -> vector<2x64xf32>
    %c0_26 = arith.constant 0 : index
    %c0_27 = arith.constant 0 : index
    %40 = vector.load %arg8[%c0_26, %c0_27] : memref<2x1xf32, #tpu.memory_space<vmem>>, vector<2x1xf32>
    %41 = vector.broadcast %40 : vector<2x1xf32> to vector<2x64xf32>
    %42 = arith.addf %39, %41 : vector<2x64xf32>
    %c0_28 = arith.constant 0 : index
    %c0_29 = arith.constant 0 : index
    %43 = vector.load %arg9[%c0_28, %c0_29] : memref<2x64xf32, #tpu.memory_space<vmem>>, vector<2x64xf32>
    tpu.vector_store %arg9[%c0_28, %c0_29], %42 {strides = array<i32>} : memref<2x64xf32, #tpu.memory_space<vmem>>, vector<2x64xf32>,
    return
  }
  func.func @transform_0(%arg0: i32) -> (i32, i32) {
    %c0_i32 = arith.constant 0 : i32
    %c0_i32_0 = arith.constant 0 : i32
    return %arg0, %c0_i32 : i32, i32
  }
  func.func @transform_1(%arg0: i32) -> (i32, i32) {
    %c0_i32 = arith.constant 0 : i32
    %c0_i32_0 = arith.constant 0 : i32
    return %arg0, %c0_i32 : i32, i32
  }
  func.func @transform_2(%arg0: i32) -> (i32, i32) {
    %c0_i32 = arith.constant 0 : i32
    %c0_i32_0 = arith.constant 0 : i32
    %c0_i32_1 = arith.constant 0 : i32
    return %c0_i32, %c0_i32_0 : i32, i32
  }
  func.func @transform_3(%arg0: i32) -> (i32, i32) {
    %c0_i32 = arith.constant 0 : i32
    %c0_i32_0 = arith.constant 0 : i32
    %c0_i32_1 = arith.constant 0 : i32
    return %c0_i32, %c0_i32_0 : i32, i32
  }
  func.func @transform_4(%arg0: i32) -> (i32, i32) {
    %c0_i32 = arith.constant 0 : i32
    %c0_i32_0 = arith.constant 0 : i32
    %c0_i32_1 = arith.constant 0 : i32
    return %c0_i32, %c0_i32_0 : i32, i32
  }
  func.func @transform_5(%arg0: i32) -> (i32, i32) {
    %c0_i32 = arith.constant 0 : i32
    %c0_i32_0 = arith.constant 0 : i32
    %c0_i32_1 = arith.constant 0 : i32
    return %c0_i32, %c0_i32_0 : i32, i32
  }
  func.func @transform_6(%arg0: i32) -> (i32, i32) {
    %c0_i32 = arith.constant 0 : i32
    %c0_i32_0 = arith.constant 0 : i32
    %c0_i32_1 = arith.constant 0 : i32
    return %c0_i32, %c0_i32_0 : i32, i32
  }
  func.func @transform_7(%arg0: i32) -> (i32, i32) {
    %c0_i32 = arith.constant 0 : i32
    %c0_i32_0 = arith.constant 0 : i32
    %c0_i32_1 = arith.constant 0 : i32
    return %c0_i32, %c0_i32_0 : i32, i32
  }
  func.func @transform_8(%arg0: i32) -> (i32, i32) {
    %c0_i32 = arith.constant 0 : i32
    %c0_i32_0 = arith.constant 0 : i32
    return %c0_i32, %arg0 : i32, i32
  }
}

</mosaic_0001>

<llo_original>
// kernel: tpu_custom_call.1
$region0: #{tpu_custom_call.1}
  #allocation0 [shape = 'u32[]', space=smem, size = 0x4, offset = 0x4, fixed_abs, tag = 'smem constant byte address 0x4 - core index']
  #allocation1 [shape = 'u32[144,128]{1,0:T(1,128)}', space=vmem, size = 0x12000, scoped, tag = 'internal scratch']
  %s0 = inlined_call_operand.vmem [shape: s32[64,2], index: 0, kind: input, shape index: {}]
  %s1 = inlined_call_operand.vmem [shape: f32[64,32], index: 1, kind: input, shape index: {}]
  %s2 = inlined_call_operand.vmem [shape: bf16[20,32], index: 2, kind: input, shape index: {}]
  %s3 = inlined_call_operand.vmem [shape: bf16[24,32], index: 3, kind: input, shape index: {}]
  %s4 = inlined_call_operand.vmem [shape: bf16[96,128], index: 4, kind: input, shape index: {}]
  %s5 = inlined_call_operand.vmem [shape: f32[1,128], index: 5, kind: input, shape index: {}]
  %s6 = inlined_call_operand.vmem [shape: bf16[2,128], index: 6, kind: input, shape index: {}]
  %s7 = inlined_call_operand.vmem [shape: f32[2,1], index: 7, kind: input, shape index: {}]
  %s8 = inlined_call_operand.hbm [shape: f32[2,64], index: 8, kind: output, shape index: {}]
  %s9 = sld [smem:[#allocation0]]
  $region42: #{tpu_custom_call.1} parent=0
    _
  %s11 = ssub.s32 1, %s9
  %s12 = scalar_select 0, %s11, %s9
  $region1: #{tpu_custom_call.1} parent=0
    #allocation2 [shape = 'u8[1024]{0}', space=vmem, size = 0x400, scoped, tag = 'output window, operand 0, single buffered']
    #allocation3 [shape = 's32[1]{0}', space=sflag, size = 0x4, scoped, tag = 'scoped memory for tpu_custom_call.1']
    %13 = vsyncpa [#allocation3], 0
    // Predicated region
    $region2: #{tpu_custom_call.1} parent=1 // pred_check
      _
    $region3: #{tpu_custom_call.1} parent=1 // pred_check_branch
      %15 = sbr.rel (0) target = $region5
    $region4: #{tpu_custom_call.1} parent=1 // pred_region
      _
    $region5: #{tpu_custom_call.1} parent=1 // pred_fallthru
      _
    // Predicated region
    $region6: #{tpu_custom_call.1} parent=1 // pred_check
      _
    $region7: #{tpu_custom_call.1} parent=1 // pred_check_branch
      %17 = sbr.rel (0) target = $region9
    $region8: #{tpu_custom_call.1} parent=1 // pred_region
      _
    $region9: #{tpu_custom_call.1} parent=1 // pred_fallthru
      _
    // Predicated region
    $region10: #{tpu_custom_call.1} parent=1 // pred_check
      _
    $region11: #{tpu_custom_call.1} parent=1 // pred_check_branch
      %19 = sbr.rel (0) target = $region13
    $region12: #{tpu_custom_call.1} parent=1 // pred_region
      _
    $region13: #{tpu_custom_call.1} parent=1 // pred_fallthru
      _
    // Predicated region
    $region14: #{tpu_custom_call.1} parent=1 // pred_check
      _
    $region15: #{tpu_custom_call.1} parent=1 // pred_check_branch
      %21 = sbr.rel (0) target = $region17
    $region16: #{tpu_custom_call.1} parent=1 // pred_region
      _
    $region17: #{tpu_custom_call.1} parent=1 // pred_fallthru
      _
    // Predicated region
    $region18: #{tpu_custom_call.1} parent=1 // pred_check
      _
    $region19: #{tpu_custom_call.1} parent=1 // pred_check_branch
      %23 = sbr.rel (0) target = $region21
    $region20: #{tpu_custom_call.1} parent=1 // pred_region
      _
    $region21: #{tpu_custom_call.1} parent=1 // pred_fallthru
      _
    // Predicated region
    $region22: #{tpu_custom_call.1} parent=1 // pred_check
      _
    $region23: #{tpu_custom_call.1} parent=1 // pred_check_branch
      %25 = sbr.rel (0) target = $region25
    $region24: #{tpu_custom_call.1} parent=1 // pred_region
      _
    $region25: #{tpu_custom_call.1} parent=1 // pred_fallthru
      _
    // Predicated region
    $region26: #{tpu_custom_call.1} parent=1 // pred_check
      _
    $region27: #{tpu_custom_call.1} parent=1 // pred_check_branch
      %27 = sbr.rel (0) target = $region29
    $region28: #{tpu_custom_call.1} parent=1 // pred_region
      _
    $region29: #{tpu_custom_call.1} parent=1 // pred_fallthru
      _
    // Predicated region
    $region30: #{tpu_custom_call.1} parent=1 // pred_check
      _
    $region31: #{tpu_custom_call.1} parent=1 // pred_check_branch
      %29 = sbr.rel (0) target = $region33
    $region32: #{tpu_custom_call.1} parent=1 // pred_region
      _
    $region33: #{tpu_custom_call.1} parent=1 // pred_fallthru
      _
    %v31 = vld [vmem:[%s0] sm:$0xff]
    %v32 = vld [vmem:[%s0 + $0x8] sm:$0xff]
    %v33 = vld [vmem:[%s0 + $0x10] sm:$0xff]
    %v34 = vld [vmem:[%s0 + $0x18] sm:$0xff]
    %v35 = vld [vmem:[%s0 + $0x20] sm:$0xff]
    %v36 = vld [vmem:[%s0 + $0x28] sm:$0xff]
    %v37 = vld [vmem:[%s0 + $0x30] sm:$0xff]
    %v38 = vld [vmem:[%s0 + $0x38] sm:$0xff]
    %v39 = vlaneseq
    %v40 = vand.u32 %v39, 127
    %41 = vset.pattern.permute.xlu0 0
    %42 = vperm.xlu0 %41, %v31
    %v43 = vpop.permute.xlu0 %42
    %44 = vset.pattern.permute.xlu0 0
    %45 = vperm.xlu0 %44, %v32
    %v46 = vpop.permute.xlu0 %45
    %47 = vset.pattern.permute.xlu0 0
    %48 = vperm.xlu0 %47, %v33
    %v49 = vpop.permute.xlu0 %48
    %50 = vset.pattern.permute.xlu0 0
    %51 = vperm.xlu0 %50, %v34
    %v52 = vpop.permute.xlu0 %51
    %53 = vset.pattern.permute.xlu0 0
    %54 = vperm.xlu0 %53, %v35
    %v55 = vpop.permute.xlu0 %54
    %56 = vset.pattern.permute.xlu0 0
    %57 = vperm.xlu0 %56, %v36
    %v58 = vpop.permute.xlu0 %57
    %59 = vset.pattern.permute.xlu0 0
    %60 = vperm.xlu0 %59, %v37
    %v61 = vpop.permute.xlu0 %60
    %62 = vset.pattern.permute.xlu0 0
    %63 = vperm.xlu0 %62, %v38
    %v64 = vpop.permute.xlu0 %63
    %vm65 = vcmp.eq.s32.totalorder %v40, %v43
    %vm66 = vcmp.eq.s32.totalorder %v40, %v46
    %vm67 = vcmp.eq.s32.totalorder %v40, %v49
    %vm68 = vcmp.eq.s32.totalorder %v40, %v52
    %vm69 = vcmp.eq.s32.totalorder %v40, %v55
    %vm70 = vcmp.eq.s32.totalorder %v40, %v58
    %vm71 = vcmp.eq.s32.totalorder %v40, %v61
    %vm72 = vcmp.eq.s32.totalorder %v40, %v64
    %v73 = vsel %vm65, 1.0, 0.0
    %v74 = vsel %vm66, 1.0, 0.0
    %v75 = vsel %vm67, 1.0, 0.0
    %v76 = vsel %vm68, 1.0, 0.0
    %v77 = vsel %vm69, 1.0, 0.0
    %v78 = vsel %vm70, 1.0, 0.0
    %v79 = vsel %vm71, 1.0, 0.0
    %v80 = vsel %vm72, 1.0, 0.0
    %v81 = vpack.c.bf16 %v74, %v73
    %v82 = vpack.c.bf16 %v76, %v75
    %v83 = vpack.c.bf16 %v78, %v77
    %v84 = vpack.c.bf16 %v80, %v79
    %85 = vset.pattern.permute.xlu0 1
    %86 = vperm.xlu0 %85, %v31
    %v87 = vpop.permute.xlu0 %86
    %88 = vset.pattern.permute.xlu0 1
    %89 = vperm.xlu0 %88, %v32
    %v90 = vpop.permute.xlu0 %89
    %91 = vset.pattern.permute.xlu0 1
    %92 = vperm.xlu0 %91, %v33
    %v93 = vpop.permute.xlu0 %92
    %94 = vset.pattern.permute.xlu0 1
    %95 = vperm.xlu0 %94, %v34
    %v96 = vpop.permute.xlu0 %95
    %97 = vset.pattern.permute.xlu0 1
    %98 = vperm.xlu0 %97, %v35
    %v99 = vpop.permute.xlu0 %98
    %100 = vset.pattern.permute.xlu0 1
    %101 = vperm.xlu0 %100, %v36
    %v102 = vpop.permute.xlu0 %101
    %103 = vset.pattern.permute.xlu0 1
    %104 = vperm.xlu0 %103, %v37
    %v105 = vpop.permute.xlu0 %104
    %106 = vset.pattern.permute.xlu0 1
    %107 = vperm.xlu0 %106, %v38
    %v108 = vpop.permute.xlu0 %107
    %vm109 = vcmp.eq.s32.totalorder %v40, %v87
    %vm110 = vcmp.eq.s32.totalorder %v40, %v90
    %vm111 = vcmp.eq.s32.totalorder %v40, %v93
    %vm112 = vcmp.eq.s32.totalorder %v40, %v96
    %vm113 = vcmp.eq.s32.totalorder %v40, %v99
    %vm114 = vcmp.eq.s32.totalorder %v40, %v102
    %vm115 = vcmp.eq.s32.totalorder %v40, %v105
    %vm116 = vcmp.eq.s32.totalorder %v40, %v108
    %v117 = vsel %vm109, 1.0, 0.0
    %v118 = vsel %vm110, 1.0, 0.0
    %v119 = vsel %vm111, 1.0, 0.0
    %v120 = vsel %vm112, 1.0, 0.0
    %v121 = vsel %vm113, 1.0, 0.0
    %v122 = vsel %vm114, 1.0, 0.0
    %v123 = vsel %vm115, 1.0, 0.0
    %v124 = vsel %vm116, 1.0, 0.0
    %v125 = vpack.c.bf16 %v118, %v117
    %v126 = vpack.c.bf16 %v120, %v119
    %v127 = vpack.c.bf16 %v122, %v121
    %v128 = vpack.c.bf16 %v124, %v123
    %v129 = vld [vmem:[%s2] sm:$0xf]
    %v130 = vld [vmem:[%s2 + $0x4] sm:$0xf]
    %v131 = vld [vmem:[%s2 + $0x8] sm:$0x3]
    %v135 = vunpack.c.l.b16 %v129
    %v136 = vunpack.c.l.b16 %v130
    %v137 = vunpack.c.l.b16 %v131
    %v138 = vpack.c.b16 %v136, %v135
    %v139 = vpack.c.b16 %v137, %v137
    %vm141 = vcmask 162816
    %v143 = vsel %vm141, %v81, 0
    %v146 = vsel %vm141, %v82, 0
    %v149 = vsel %vm141, %v83, 0
    %v152 = vsel %vm141, %v84, 0
    %vm154 = vcmask 1041408
    %v156 = vsel %vm154, %v139, 0
    %158 = vmatprep.subr.bf16.mxu0 0
    %159 = vmatpush1.bf16.msra.mxu0 0
    %160 = vmatprep.subr.bf16.mxu0 0
    %161 = vmatpush1.bf16.msra.mxu0 0
    %162 = vmatprep.subr.bf16.mxu0 0
    %163 = vmatpush1.bf16.msra.mxu0 0
    %164 = vmatprep.subr.bf16.mxu0 0
    %165 = vmatpush1.bf16.msra.mxu0 0
    %166 = vmatprep.subr.bf16.mxu0 0
    %167 = vmatpush1.bf16.msra.mxu0 0
    %168 = vmatprep.subr.bf16.mxu0 0
    %169 = vmatpush1.bf16.msra.mxu0 0
    %170 = vmatprep.subr.bf16.mxu0 0
    %171 = vmatpush1.bf16.msra.mxu0 %v156
    %172 = vmatprep.subr.bf16.mxu0 0
    %173 = vmatpush1.bf16.msra.mxu0 %v138
    %174 = vmatprep.subr.bf16.mxu0 0
    %175 = vmatpush2.bf16.msra.mxu0 0
    %176 = vmatprep.subr.bf16.mxu0 0
    %177 = vmatpush2.bf16.msra.mxu0 0
    %178 = vmatprep.subr.bf16.mxu0 0
    %179 = vmatpush2.bf16.msra.mxu0 0
    %180 = vmatprep.subr.bf16.mxu0 0
    %181 = vmatpush2.bf16.msra.mxu0 0
    %182 = vmatprep.subr.bf16.mxu0 0
    %183 = vmatpush2.bf16.msra.mxu0 0
    %184 = vmatprep.subr.bf16.mxu0 0
    %185 = vmatpush2.bf16.msra.mxu0 0
    %186 = vmatprep.subr.bf16.mxu0 0
    %187 = vmatpush2.bf16.msra.mxu0 0
    %188 = vmatprep.subr.bf16.mxu0 0
    %189 = vmatpush2.bf16.msra.mxu0 0
    %190 = vmatprep.mubr.bf16.mxu0 0
    %191 = vmatmul.mubr.bf16.gmra.mxu0 %v143
    %v192 = vpop.f32.mrf.mxu0
    %v193 = vadd.f32 0.0, %v192
    %v194 = vpop.f32.mrf.mxu0
    %v195 = vpop.f32.mrf.mxu0
    %v196 = vadd.f32 0.0, %v195
    %v197 = vpop.f32.mrf.mxu0
    %198 = vmatprep.mubr.bf16.mxu0 0
    %199 = vmatmul.mubr.bf16.gmra.mxu0 %v146
    %v200 = vpop.f32.mrf.mxu0
    %v201 = vadd.f32 0.0, %v200
    %v202 = vpop.f32.mrf.mxu0
    %v203 = vpop.f32.mrf.mxu0
    %v204 = vadd.f32 0.0, %v203
    %v205 = vpop.f32.mrf.mxu0
    %206 = vmatprep.mubr.bf16.mxu0 0
    %207 = vmatmul.mubr.bf16.gmra.mxu0 %v149
    %v208 = vpop.f32.mrf.mxu0
    %v209 = vadd.f32 0.0, %v208
    %v210 = vpop.f32.mrf.mxu0
    %v211 = vpop.f32.mrf.mxu0
    %v212 = vadd.f32 0.0, %v211
    %v213 = vpop.f32.mrf.mxu0
    %214 = vmatprep.mubr.bf16.mxu0 0
    %215 = vmatmul.mubr.bf16.gmra.mxu0 %v152
    %v216 = vpop.f32.mrf.mxu0
    %v217 = vadd.f32 0.0, %v216
    %v218 = vpop.f32.mrf.mxu0
    %v219 = vpop.f32.mrf.mxu0
    %v220 = vadd.f32 0.0, %v219
    %v221 = vpop.f32.mrf.mxu0
    %222 = vdwg.mxu0
    %v223 = vpack.c.bf16 %v196, %v193
    %v224 = vpack.c.bf16 %v204, %v201
    %v225 = vpack.c.bf16 %v212, %v209
    %v226 = vpack.c.bf16 %v220, %v217
    %v227 = vld [vmem:[%s3] sm:$0xf]
    %v228 = vld [vmem:[%s3 + $0x4] sm:$0xf]
    %v229 = vld [vmem:[%s3 + $0x8] sm:$0xf]
    %v233 = vunpack.c.l.b16 %v227
    %v234 = vunpack.c.l.b16 %v228
    %v235 = vunpack.c.l.b16 %v229
    %v236 = vpack.c.b16 %v234, %v233
    %v237 = vpack.c.b16 %v235, %v235
    %vm239 = vcmask 195584
    %v241 = vsel %vm239, %v125, 0
    %v244 = vsel %vm239, %v126, 0
    %v247 = vsel %vm239, %v127, 0
    %v250 = vsel %vm239, %v128, 0
    %vm252 = vcmask 1043456
    %v254 = vsel %vm252, %v237, 0
    %256 = vmatprep.subr.bf16.mxu0 0
    %257 = vmatpush1.bf16.msra.mxu0 0
    %258 = vmatprep.subr.bf16.mxu0 0
    %259 = vmatpush1.bf16.msra.mxu0 0
    %260 = vmatprep.subr.bf16.mxu0 0
    %261 = vmatpush1.bf16.msra.mxu0 0
    %262 = vmatprep.subr.bf16.mxu0 0
    %263 = vmatpush1.bf16.msra.mxu0 0
    %264 = vmatprep.subr.bf16.mxu0 0
    %265 = vmatpush1.bf16.msra.mxu0 0
    %266 = vmatprep.subr.bf16.mxu0 0
    %267 = vmatpush1.bf16.msra.mxu0 0
    %268 = vmatprep.subr.bf16.mxu0 0
    %269 = vmatpush1.bf16.msra.mxu0 %v254
    %270 = vmatprep.subr.bf16.mxu0 0
    %271 = vmatpush1.bf16.msra.mxu0 %v236
    %272 = vmatprep.subr.bf16.mxu0 0
    %273 = vmatpush2.bf16.msra.mxu0 0
    %274 = vmatprep.subr.bf16.mxu0 0
    %275 = vmatpush2.bf16.msra.mxu0 0
    %276 = vmatprep.subr.bf16.mxu0 0
    %277 = vmatpush2.bf16.msra.mxu0 0
    %278 = vmatprep.subr.bf16.mxu0 0
    %279 = vmatpush2.bf16.msra.mxu0 0
    %280 = vmatprep.subr.bf16.mxu0 0
    %281 = vmatpush2.bf16.msra.mxu0 0
    %282 = vmatprep.subr.bf16.mxu0 0
    %283 = vmatpush2.bf16.msra.mxu0 0
    %284 = vmatprep.subr.bf16.mxu0 0
    %285 = vmatpush2.bf16.msra.mxu0 0
    %286 = vmatprep.subr.bf16.mxu0 0
    %287 = vmatpush2.bf16.msra.mxu0 0
    %288 = vmatprep.mubr.bf16.mxu0 0
    %289 = vmatmul.mubr.bf16.gmra.mxu0 %v241
    %v290 = vpop.f32.mrf.mxu0
    %v291 = vadd.f32 0.0, %v290
    %v292 = vpop.f32.mrf.mxu0
    %v293 = vpop.f32.mrf.mxu0
    %v294 = vadd.f32 0.0, %v293
    %v295 = vpop.f32.mrf.mxu0
    %296 = vmatprep.mubr.bf16.mxu0 0
    %297 = vmatmul.mubr.bf16.gmra.mxu0 %v244
    %v298 = vpop.f32.mrf.mxu0
    %v299 = vadd.f32 0.0, %v298
    %v300 = vpop.f32.mrf.mxu0
    %v301 = vpop.f32.mrf.mxu0
    %v302 = vadd.f32 0.0, %v301
    %v303 = vpop.f32.mrf.mxu0
    %304 = vmatprep.mubr.bf16.mxu0 0
    %305 = vmatmul.mubr.bf16.gmra.mxu0 %v247
    %v306 = vpop.f32.mrf.mxu0
    %v307 = vadd.f32 0.0, %v306
    %v308 = vpop.f32.mrf.mxu0
    %v309 = vpop.f32.mrf.mxu0
    %v310 = vadd.f32 0.0, %v309
    %v311 = vpop.f32.mrf.mxu0
    %312 = vmatprep.mubr.bf16.mxu0 0
    %313 = vmatmul.mubr.bf16.gmra.mxu0 %v250
    %v314 = vpop.f32.mrf.mxu0
    %v315 = vadd.f32 0.0, %v314
    %v316 = vpop.f32.mrf.mxu0
    %v317 = vpop.f32.mrf.mxu0
    %v318 = vadd.f32 0.0, %v317
    %v319 = vpop.f32.mrf.mxu0
    %320 = vdwg.mxu0
    %v321 = vpack.c.bf16 %v294, %v291
    %v322 = vpack.c.bf16 %v302, %v299
    %v323 = vpack.c.bf16 %v310, %v307
    %v324 = vpack.c.bf16 %v318, %v315
    %v325 = vld [vmem:[%s1] sm:$0xff]
    %v326 = vld [vmem:[%s1 + $0x8] sm:$0xff]
    %v327 = vld [vmem:[%s1 + $0x10] sm:$0xff]
    %v328 = vld [vmem:[%s1 + $0x18] sm:$0xff]
    %v329 = vld [vmem:[%s1 + $0x20] sm:$0xff]
    %v330 = vld [vmem:[%s1 + $0x28] sm:$0xff]
    %v331 = vld [vmem:[%s1 + $0x30] sm:$0xff]
    %v332 = vld [vmem:[%s1 + $0x38] sm:$0xff]
    %v333 = vpack.c.bf16 %v326, %v325
    %v334 = vpack.c.bf16 %v328, %v327
    %v335 = vpack.c.bf16 %v330, %v329
    %v336 = vpack.c.bf16 %v332, %v331
    %v337 = vld [vmem:[%s4] sm:$0xf]
    %v338 = vld [vmem:[%s4 + $0x4] sm:$0xf]
    %v339 = vld [vmem:[%s4 + $0x8] sm:$0xf]
    %v340 = vld [vmem:[%s4 + $0xc] sm:$0xf]
    %v341 = vld [vmem:[%s4 + $0x10] sm:$0xf]
    %v342 = vld [vmem:[%s4 + $0x14] sm:$0xf]
    %v343 = vld [vmem:[%s4 + $0x18] sm:$0xf]
    %v344 = vld [vmem:[%s4 + $0x1c] sm:$0xf]
    %v349 = vunpack.c.l.b16 %v341
    %v350 = vunpack.c.l.b16 %v342
    %v351 = vunpack.c.l.b16 %v343
    %v352 = vunpack.c.l.b16 %v344
    %v353 = vpack.c.b16 %v350, %v349
    %v354 = vpack.c.b16 %v352, %v351
    %vm357 = vcmask 261120
    %v359 = vsel %vm357, %v321, 0
    %v362 = vsel %vm357, %v322, 0
    %v365 = vsel %vm357, %v323, 0
    %v368 = vsel %vm357, %v324, 0
    %370 = vmatprep.subr.bf16.mxu0 0
    %371 = vmatpush1.bf16.msra.mxu0 0
    %372 = vmatprep.subr.bf16.mxu0 0
    %373 = vmatpush1.bf16.msra.mxu0 0
    %374 = vmatprep.subr.bf16.mxu0 0
    %375 = vmatpush1.bf16.msra.mxu0 0
    %376 = vmatprep.subr.bf16.mxu0 0
    %377 = vmatpush1.bf16.msra.mxu0 0
    %378 = vmatprep.subr.bf16.mxu0 0
    %379 = vmatpush1.bf16.msra.mxu0 0
    %380 = vmatprep.subr.bf16.mxu0 0
    %381 = vmatpush1.bf16.msra.mxu0 0
    %382 = vmatprep.subr.bf16.mxu0 0
    %383 = vmatpush1.bf16.msra.mxu0 %v354
    %384 = vmatprep.subr.bf16.mxu0 0
    %385 = vmatpush1.bf16.msra.mxu0 %v353
    %386 = vmatprep.subr.bf16.mxu0 0
    %387 = vmatpush2.bf16.msra.mxu0 0
    %388 = vmatprep.subr.bf16.mxu0 0
    %389 = vmatpush2.bf16.msra.mxu0 0
    %390 = vmatprep.subr.bf16.mxu0 0
    %391 = vmatpush2.bf16.msra.mxu0 0
    %392 = vmatprep.subr.bf16.mxu0 0
    %393 = vmatpush2.bf16.msra.mxu0 0
    %394 = vmatprep.subr.bf16.mxu0 0
    %395 = vmatpush2.bf16.msra.mxu0 0
    %396 = vmatprep.subr.bf16.mxu0 0
    %397 = vmatpush2.bf16.msra.mxu0 0
    %398 = vmatprep.subr.bf16.mxu0 0
    %399 = vmatpush2.bf16.msra.mxu0 0
    %400 = vmatprep.subr.bf16.mxu0 0
    %401 = vmatpush2.bf16.msra.mxu0 0
    %402 = vmatprep.mubr.bf16.mxu0 0
    %403 = vmatmul.mubr.bf16.gmra.mxu0 %v359
    %v404 = vpop.f32.mrf.mxu0
    %v405 = vadd.f32 0.0, %v404
    %v406 = vpop.f32.mrf.mxu0
    %v407 = vpop.f32.mrf.mxu0
    %v408 = vadd.f32 0.0, %v407
    %v409 = vpop.f32.mrf.mxu0
    %410 = vmatprep.mubr.bf16.mxu0 0
    %411 = vmatmul.mubr.bf16.gmra.mxu0 %v362
    %v412 = vpop.f32.mrf.mxu0
    %v413 = vadd.f32 0.0, %v412
    %v414 = vpop.f32.mrf.mxu0
    %v415 = vpop.f32.mrf.mxu0
    %v416 = vadd.f32 0.0, %v415
    %v417 = vpop.f32.mrf.mxu0
    %418 = vmatprep.mubr.bf16.mxu0 0
    %419 = vmatmul.mubr.bf16.gmra.mxu0 %v365
    %v420 = vpop.f32.mrf.mxu0
    %v421 = vadd.f32 0.0, %v420
    %v422 = vpop.f32.mrf.mxu0
    %v423 = vpop.f32.mrf.mxu0
    %v424 = vadd.f32 0.0, %v423
    %v425 = vpop.f32.mrf.mxu0
    %426 = vmatprep.mubr.bf16.mxu0 0
    %427 = vmatmul.mubr.bf16.gmra.mxu0 %v368
    %v428 = vpop.f32.mrf.mxu0
    %v429 = vadd.f32 0.0, %v428
    %v430 = vpop.f32.mrf.mxu0
    %v431 = vpop.f32.mrf.mxu0
    %v432 = vadd.f32 0.0, %v431
    %v433 = vpop.f32.mrf.mxu0
    %434 = vdwg.mxu0
    %v439 = vunpack.c.l.b16 %v337
    %v440 = vunpack.c.l.b16 %v338
    %v441 = vunpack.c.l.b16 %v339
    %v442 = vunpack.c.l.b16 %v340
    %v443 = vpack.c.b16 %v440, %v439
    %v444 = vpack.c.b16 %v442, %v441
    %v448 = vsel %vm357, %v223, 0
    %v451 = vsel %vm357, %v224, 0
    %v454 = vsel %vm357, %v225, 0
    %v457 = vsel %vm357, %v226, 0
    %459 = vmatprep.subr.bf16.mxu0 0
    %460 = vmatpush1.bf16.msra.mxu0 0
    %461 = vmatprep.subr.bf16.mxu0 0
    %462 = vmatpush1.bf16.msra.mxu0 0
    %463 = vmatprep.subr.bf16.mxu0 0
    %464 = vmatpush1.bf16.msra.mxu0 0
    %465 = vmatprep.subr.bf16.mxu0 0
    %466 = vmatpush1.bf16.msra.mxu0 0
    %467 = vmatprep.subr.bf16.mxu0 0
    %468 = vmatpush1.bf16.msra.mxu0 0
    %469 = vmatprep.subr.bf16.mxu0 0
    %470 = vmatpush1.bf16.msra.mxu0 0
    %471 = vmatprep.subr.bf16.mxu0 0
    %472 = vmatpush1.bf16.msra.mxu0 %v444
    %473 = vmatprep.subr.bf16.mxu0 0
    %474 = vmatpush1.bf16.msra.mxu0 %v443
    %475 = vmatprep.subr.bf16.mxu0 0
    %476 = vmatpush2.bf16.msra.mxu0 0
    %477 = vmatprep.subr.bf16.mxu0 0
    %478 = vmatpush2.bf16.msra.mxu0 0
    %479 = vmatprep.subr.bf16.mxu0 0
    %480 = vmatpush2.bf16.msra.mxu0 0
    %481 = vmatprep.subr.bf16.mxu0 0
    %482 = vmatpush2.bf16.msra.mxu0 0
    %483 = vmatprep.subr.bf16.mxu0 0
    %484 = vmatpush2.bf16.msra.mxu0 0
    %485 = vmatprep.subr.bf16.mxu0 0
    %486 = vmatpush2.bf16.msra.mxu0 0
    %487 = vmatprep.subr.bf16.mxu0 0
    %488 = vmatpush2.bf16.msra.mxu0 0
    %489 = vmatprep.subr.bf16.mxu0 0
    %490 = vmatpush2.bf16.msra.mxu0 0
    %491 = vmatprep.mubr.bf16.mxu0 0
    %492 = vmatmul.mubr.bf16.gmra.mxu0 %v448
    %v493 = vpop.f32.mrf.mxu0
    %v494 = vadd.f32 %v405, %v493
    %v495 = vpop.f32.mrf.mxu0
    %v496 = vpop.f32.mrf.mxu0
    %v497 = vadd.f32 %v408, %v496
    %v498 = vpop.f32.mrf.mxu0
    %499 = vmatprep.mubr.bf16.mxu0 0
    %500 = vmatmul.mubr.bf16.gmra.mxu0 %v451
    %v501 = vpop.f32.mrf.mxu0
    %v502 = vadd.f32 %v413, %v501
    %v503 = vpop.f32.mrf.mxu0
    %v504 = vpop.f32.mrf.mxu0
    %v505 = vadd.f32 %v416, %v504
    %v506 = vpop.f32.mrf.mxu0
    %507 = vmatprep.mubr.bf16.mxu0 0
    %508 = vmatmul.mubr.bf16.gmra.mxu0 %v454
    %v509 = vpop.f32.mrf.mxu0
    %v510 = vadd.f32 %v421, %v509
    %v511 = vpop.f32.mrf.mxu0
    %v512 = vpop.f32.mrf.mxu0
    %v513 = vadd.f32 %v424, %v512
    %v514 = vpop.f32.mrf.mxu0
    %515 = vmatprep.mubr.bf16.mxu0 0
    %516 = vmatmul.mubr.bf16.gmra.mxu0 %v457
    %v517 = vpop.f32.mrf.mxu0
    %v518 = vadd.f32 %v429, %v517
    %v519 = vpop.f32.mrf.mxu0
    %v520 = vpop.f32.mrf.mxu0
    %v521 = vadd.f32 %v432, %v520
    %v522 = vpop.f32.mrf.mxu0
    %523 = vdwg.mxu0
    %v524 = vld [vmem:[%s4 + $0x20] sm:$0xf]
    %v525 = vld [vmem:[%s4 + $0x24] sm:$0xf]
    %v526 = vld [vmem:[%s4 + $0x28] sm:$0xf]
    %v527 = vld [vmem:[%s4 + $0x2c] sm:$0xf]
    %v532 = vunpack.c.l.b16 %v524
    %v533 = vunpack.c.l.b16 %v525
    %v534 = vunpack.c.l.b16 %v526
    %v535 = vunpack.c.l.b16 %v527
    %v536 = vpack.c.b16 %v533, %v532
    %v537 = vpack.c.b16 %v535, %v534
    %v541 = vsel %vm357, %v333, 0
    %v544 = vsel %vm357, %v334, 0
    %v547 = vsel %vm357, %v335, 0
    %v550 = vsel %vm357, %v336, 0
    %552 = vmatprep.subr.bf16.mxu0 0
    %553 = vmatpush1.bf16.msra.mxu0 0
    %554 = vmatprep.subr.bf16.mxu0 0
    %555 = vmatpush1.bf16.msra.mxu0 0
    %556 = vmatprep.subr.bf16.mxu0 0
    %557 = vmatpush1.bf16.msra.mxu0 0
    %558 = vmatprep.subr.bf16.mxu0 0
    %559 = vmatpush1.bf16.msra.mxu0 0
    %560 = vmatprep.subr.bf16.mxu0 0
    %561 = vmatpush1.bf16.msra.mxu0 0
    %562 = vmatprep.subr.bf16.mxu0 0
    %563 = vmatpush1.bf16.msra.mxu0 0
    %564 = vmatprep.subr.bf16.mxu0 0
    %565 = vmatpush1.bf16.msra.mxu0 %v537
    %566 = vmatprep.subr.bf16.mxu0 0
    %567 = vmatpush1.bf16.msra.mxu0 %v536
    %568 = vmatprep.subr.bf16.mxu0 0
    %569 = vmatpush2.bf16.msra.mxu0 0
    %570 = vmatprep.subr.bf16.mxu0 0
    %571 = vmatpush2.bf16.msra.mxu0 0
    %572 = vmatprep.subr.bf16.mxu0 0
    %573 = vmatpush2.bf16.msra.mxu0 0
    %574 = vmatprep.subr.bf16.mxu0 0
    %575 = vmatpush2.bf16.msra.mxu0 0
    %576 = vmatprep.subr.bf16.mxu0 0
    %577 = vmatpush2.bf16.msra.mxu0 0
    %578 = vmatprep.subr.bf16.mxu0 0
    %579 = vmatpush2.bf16.msra.mxu0 0
    %580 = vmatprep.subr.bf16.mxu0 0
    %581 = vmatpush2.bf16.msra.mxu0 0
    %582 = vmatprep.subr.bf16.mxu0 0
    %583 = vmatpush2.bf16.msra.mxu0 0
    %584 = vmatprep.mubr.bf16.mxu0 0
    %585 = vmatmul.mubr.bf16.gmra.mxu0 %v541
    %v586 = vpop.f32.mrf.mxu0
    %v587 = vadd.f32 0.0, %v586
    %v588 = vpop.f32.mrf.mxu0
    %v589 = vpop.f32.mrf.mxu0
    %v590 = vadd.f32 0.0, %v589
    %v591 = vpop.f32.mrf.mxu0
    %592 = vmatprep.mubr.bf16.mxu0 0
    %593 = vmatmul.mubr.bf16.gmra.mxu0 %v544
    %v594 = vpop.f32.mrf.mxu0
    %v595 = vadd.f32 0.0, %v594
    %v596 = vpop.f32.mrf.mxu0
    %v597 = vpop.f32.mrf.mxu0
    %v598 = vadd.f32 0.0, %v597
    %v599 = vpop.f32.mrf.mxu0
    %600 = vmatprep.mubr.bf16.mxu0 0
    %601 = vmatmul.mubr.bf16.gmra.mxu0 %v547
    %v602 = vpop.f32.mrf.mxu0
    %v603 = vadd.f32 0.0, %v602
    %v604 = vpop.f32.mrf.mxu0
    %v605 = vpop.f32.mrf.mxu0
    %v606 = vadd.f32 0.0, %v605
    %v607 = vpop.f32.mrf.mxu0
    %608 = vmatprep.mubr.bf16.mxu0 0
    %609 = vmatmul.mubr.bf16.gmra.mxu0 %v550
    %v610 = vpop.f32.mrf.mxu0
    %v611 = vadd.f32 0.0, %v610
    %v612 = vpop.f32.mrf.mxu0
    %v613 = vpop.f32.mrf.mxu0
    %v614 = vadd.f32 0.0, %v613
    %v615 = vpop.f32.mrf.mxu0
    %616 = vdwg.mxu0
    %v617 = vadd.f32 %v494, %v587
    %v618 = vadd.f32 %v497, %v590
    %v619 = vadd.f32 %v502, %v595
    %v620 = vadd.f32 %v505, %v598
    %v621 = vadd.f32 %v510, %v603
    %v622 = vadd.f32 %v513, %v606
    %v623 = vadd.f32 %v518, %v611
    %v624 = vadd.f32 %v521, %v614
    %v625 = vld [vmem:[%s5] sm:$0x1]
    %v627 = vlaneseq
    %v628 = vshrl.u32 %v627, 7
    %v629 = vsub.s32 0, %v628
    %v630 = vrot.slane %v625, %v629
    %v632 = vadd.f32 %v617, %v630
    %v633 = vadd.f32 %v618, %v630
    %v634 = vadd.f32 %v619, %v630
    %v635 = vadd.f32 %v620, %v630
    %v636 = vadd.f32 %v621, %v630
    %v637 = vadd.f32 %v622, %v630
    %v638 = vadd.f32 %v623, %v630
    %v639 = vadd.f32 %v624, %v630
    %v640 = vmax.f32 %v632, 0.0
    %v641 = vmax.f32 %v633, 0.0
    %v642 = vmax.f32 %v634, 0.0
    %v643 = vmax.f32 %v635, 0.0
    %v644 = vmax.f32 %v636, 0.0
    %v645 = vmax.f32 %v637, 0.0
    %v646 = vmax.f32 %v638, 0.0
    %v647 = vmax.f32 %v639, 0.0
    %v648 = vpack.c.bf16 %v641, %v640
    %v649 = vpack.c.bf16 %v643, %v642
    %v650 = vpack.c.bf16 %v645, %v644
    %v651 = vpack.c.bf16 %v647, %v646
    %v652 = vld [vmem:[%s6] sm:$0x1]
    %v653 = vld [vmem:[%s7] sm:$0x3]
    %655 = vset.pattern.permute.xlu0 0
    %656 = vperm.xlu0 %655, %v653
    %v657 = vpop.permute.xlu0 %656
    %659 = vmatprep.subr.bf16.mxu0 0
    %660 = vmatpush1.bf16.xpose.msra.mxu0 0
    %661 = vmatprep.subr.bf16.mxu0 0
    %662 = vmatpush1.bf16.xpose.msra.mxu0 0
    %663 = vmatprep.subr.bf16.mxu0 0
    %664 = vmatpush1.bf16.xpose.msra.mxu0 0
    %665 = vmatprep.subr.bf16.mxu0 0
    %666 = vmatpush1.bf16.xpose.msra.mxu0 0
    %667 = vmatprep.subr.bf16.mxu0 0
    %668 = vmatpush1.bf16.xpose.msra.mxu0 %v651
    %669 = vmatprep.subr.bf16.mxu0 0
    %670 = vmatpush1.bf16.xpose.msra.mxu0 %v650
    %671 = vmatprep.subr.bf16.mxu0 0
    %672 = vmatpush1.bf16.xpose.msra.mxu0 %v649
    %673 = vmatprep.subr.bf16.mxu0 0
    %674 = vmatpush1.bf16.xpose.msra.mxu0 %v648
    %675 = vmatprep.subr.bf16.mxu0 0
    %676 = vmatpush2.bf16.xpose.msra.mxu0 0
    %677 = vmatprep.subr.bf16.mxu0 0
    %678 = vmatpush2.bf16.xpose.msra.mxu0 0
    %679 = vmatprep.subr.bf16.mxu0 0
    %680 = vmatpush2.bf16.xpose.msra.mxu0 0
    %681 = vmatprep.subr.bf16.mxu0 0
    %682 = vmatpush2.bf16.xpose.msra.mxu0 0
    %683 = vmatprep.subr.bf16.mxu0 0
    %684 = vmatpush2.bf16.xpose.msra.mxu0 0
    %685 = vmatprep.subr.bf16.mxu0 0
    %686 = vmatpush2.bf16.xpose.msra.mxu0 0
    %687 = vmatprep.subr.bf16.mxu0 0
    %688 = vmatpush2.bf16.xpose.msra.mxu0 0
    %689 = vmatprep.subr.bf16.mxu0 0
    %690 = vmatpush2.bf16.xpose.msra.mxu0 0
    %691 = vmatprep.mubr.bf16.mxu0 0
    %692 = vmatmul.mubr.bf16.gmra.mxu0 %v652
    %v693 = vpop.f32.mrf.mxu0
    %v694 = vadd.f32 %v657, %v693
    %v695 = vpop.f32.mrf.mxu0
    %v696 = vpop.f32.mrf.mxu0
    %v697 = vpop.f32.mrf.mxu0
    %698 = vdwg.mxu0
    %vm699 = vcmask 517120
    %700 = vst.msk [vmem:[#allocation2] sm:$0x3] %vm699, %v694
    // Predicated region
    $region34: #{tpu_custom_call.1} parent=1 // pred_check
      _
    $region35: #{tpu_custom_call.1} parent=1 // pred_check_branch
      %702 = sbr.rel (0) target = $region37
    $region36: #{tpu_custom_call.1} parent=1 // pred_region
      %s704 = ssub.s32 32, 32
      %705 = vsyncadd [#allocation3], %s704
      %s707 = sshll.u32 [#allocation2], 4
      %s708 = int_to_ptr.vmem [resolvable:$true] %s707
      %710 = dma.vmem_to_hbm [thread:$0]  %s708, 32, %s8, [#allocation3]
    $region37: #{tpu_custom_call.1} parent=1 // pred_fallthru
      _
    // Predicated region
    $region38: #{tpu_custom_call.1} parent=1 // pred_check
      _
    $region39: #{tpu_custom_call.1} parent=1 // pred_check_branch
      %712 = sbr.rel (0) target = $region41
    $region40: #{tpu_custom_call.1} parent=1 // pred_region
      %713 = dma.done [#allocation3], 32
    $region41: #{tpu_custom_call.1} parent=1 // pred_fallthru
      _
    %714 = vsyncpa [#allocation3], 1

</llo_original>
